<compile_context>
chip_gen: v7x
topology: tpu7x:2x2x1
jax: 0.10.0
libtpu: 0.0.40
codegen_flags: <defaults>
</compile_context>

<pallas_src>
from functools import partial

import jax
import jax.numpy as jnp
from jax.experimental import pallas as pl
from jax.experimental.pallas import tpu as pltpu


def _round_up(n, m):
    return ((n + m - 1) // m) * m


def _softplus(x):
    # Numerically stable softplus: max(x,0) + log1p(exp(-|x|))
    return jnp.maximum(x, 0.0) + jnp.log1p(jnp.exp(-jnp.abs(x)))


def gaussian_mlp_kernel(x_ref, w1_ref, b1_ref, wh_ref, bh_ref, out_ref, *,
                        num_mean):
    """Fused MLP forward for one batch tile.

    Weights are pre-transposed to [in, out]; the two output heads (mean / std)
    are fused into a single (H, 2*O) weight so the head layer is one MXU pass.
    Softplus is applied only to the last `num_mean` lanes (the std head) via a
    free VPU select; mean head is identity (final_layer=None).
    """
    x = x_ref[...]                                                   # (TB, In)

    # features: Linear + ReLU (+ Dropout, identity at inference)
    h = jnp.dot(x, w1_ref[...], preferred_element_type=jnp.float32) + b1_ref[...]
    h = jnp.maximum(h, 0.0)                                          # ReLU
    # TODO(synk): nn.Dropout(p=0.5) is a no-op in eval mode; training-mode
    # dropout (pltpu.prng_random_bits mask) intentionally not applied here.

    # fused heads: [mean | pre-softplus std] in one matmul
    y = jnp.dot(h, wh_ref[...], preferred_element_type=jnp.float32) + bh_ref[...]

    col = jax.lax.broadcasted_iota(jnp.int32, y.shape, 1)
    out = jnp.where(col < num_mean, y, _softplus(y))                 # id | softplus
    out_ref[...] = out.astype(out_ref.dtype)


def gaussian_regression_mlp(x, params, tile_b=4096):
    """Wrapper: param glue in plain JAX, batched/pipelined compute in Pallas.

    x: (B, input_size) float32
    params: dict of PyTorch-convention weights:
        w1 (H, In), b1 (H,), wm (O, H), bm (O,), wv (O, H), bv (O,)
    returns: (B, 2 * O) float32   — concat([mean, std], axis=1)
    """
    B, In = x.shape
    H = params["w1"].shape[0]
    O = params["wm"].shape[0]

    # Pre-transpose weights to [in, out]; fuse the two heads into one matmul.
    w1 = params["w1"].T                                              # (In, H)
    b1 = params["b1"].reshape(1, -1)                                 # (1, H)
    wh = jnp.concatenate([params["wm"].T, params["wv"].T], axis=1)   # (H, 2*O)
    bh = jnp.concatenate([params["bm"], params["bv"]]).reshape(1, -1)  # (1, 2*O)

    # Batch tile: multiple of 8, capped by tile_b, shrunk for tiny batches.
    tb = min(_round_up(tile_b, 8), _round_up(B, 8))
    Bp = _round_up(B, tb)
    if Bp != B:
        x = jnp.pad(x, ((0, Bp - B), (0, 0)))

    grid = (Bp // tb,)
    full = lambda a: pl.BlockSpec(a.shape, lambda i: (0,) * a.ndim)

    weight_bytes = 4 * (In * H + H + H * 2 * O + 2 * O)
    cost = pl.CostEstimate(
        flops=2 * Bp * (In * H + H * 2 * O),
        bytes_accessed=Bp * (In + 2 * O) * 4 + weight_bytes,
        transcendentals=Bp * O,
    )

    out = pl.pallas_call(
        partial(gaussian_mlp_kernel, num_mean=O),
        out_shape=jax.ShapeDtypeStruct((Bp, 2 * O), jnp.float32),
        grid=grid,
        in_specs=[
            pl.BlockSpec((tb, In), lambda i: (i, 0)),   # x: tiled over batch
            full(w1), full(b1),                         # weights stay resident
            full(wh), full(bh),
        ],
        out_specs=pl.BlockSpec((tb, 2 * O), lambda i: (i, 0)),
        compiler_params=pltpu.CompilerParams(
            dimension_semantics=("parallel",),
        ),
        cost_estimate=cost,
    )(x, w1, b1, wh, bh)

    return out[:B]


def init_params(key, input_size=15, hidden_size=8, output_size=4):
    """Deterministic synthetic parameters, PyTorch nn.Linear shape convention."""
    ks = jax.random.split(key, 6)

    def lin(kw, kb, fan_in, fan_out):
        bound = 1.0 / jnp.sqrt(fan_in)
        w = jax.random.uniform(kw, (fan_out, fan_in), jnp.float32, -bound, bound)
        b = jax.random.uniform(kb, (fan_out,), jnp.float32, -bound, bound)
        return w, b

    w1, b1 = lin(ks[0], ks[1], input_size, hidden_size)
    wm, bm = lin(ks[2], ks[3], hidden_size, output_size)
    wv, bv = lin(ks[4], ks[5], hidden_size, output_size)
    return dict(w1=w1, b1=b1, wm=wm, bm=bm, wv=wv, bv=bv)


def reference_forward(x, p):
    h = jnp.maximum(x @ p["w1"].T + p["b1"], 0.0)
    mean = h @ p["wm"].T + p["bm"]
    std = jax.nn.softplus(h @ p["wv"].T + p["bv"])
    return jnp.concatenate([mean, std], axis=1)


if __name__ == "__main__":
    key = jax.random.PRNGKey(0)
    k_x1, k_x2, k_p = jax.random.split(key, 3)

    IN, H, OUT = 15, 8, 4
    params = init_params(k_p, input_size=IN, hidden_size=H, output_size=OUT)

    # Small batch: single tile (tile auto-shrinks to 8 rows).
    B1 = 8
    x1 = jax.random.normal(k_x1, (B1, IN), jnp.float32)
    out1 = jax.block_until_ready(gaussian_regression_mlp(x1, params))
    ref1 = reference_forward(x1, params)
    assert out1.shape == (B1, 2 * OUT)
    assert jnp.allclose(out1, ref1, atol=1e-5, rtol=1e-5), "mismatch (B=8)"

    # Ragged batch with a small tile: exercises the grid, pipelining and the
    # pad-then-slice path (grid of 7 tiles of 16 rows).
    B2 = 100
    x2 = jax.random.normal(k_x2, (B2, IN), jnp.float32)
    out2 = jax.block_until_ready(gaussian_regression_mlp(x2, params, tile_b=16))
    ref2 = reference_forward(x2, params)
    assert out2.shape == (B2, 2 * OUT)
    assert jnp.allclose(out2, ref2, atol=1e-5, rtol=1e-5), "mismatch (B=100)"

    print("KERNEL_OK")
</pallas_src>

<mosaic_0001>
module attributes {stable_mosaic.version = 11 : i64} {
  func.func @gaussian_mlp_kernel(%arg0: i32, %arg1: memref<8x15xf32, #tpu.memory_space<vmem>>, %arg2: memref<15x8xf32, #tpu.memory_space<vmem>>, %arg3: memref<1x8xf32, #tpu.memory_space<vmem>>, %arg4: memref<8x8xf32, #tpu.memory_space<vmem>>, %arg5: memref<1x8xf32, #tpu.memory_space<vmem>>, %arg6: memref<8x8xf32, #tpu.memory_space<vmem>>) attributes {dimension_semantics = [#tpu.dimension_semantics<parallel>], iteration_bounds = array<i64: 1>, scalar_prefetch = 0 : i64, scratch_operands = 0 : i64, tpu.core_type = #tpu.core_type<tc>, window_params = [{transform_indices = @transform_0, window_bounds = array<i64: 8, 15>}, {pipeline_mode = #tpu.pipeline_mode<synchronous>, transform_indices = @transform_1, window_bounds = array<i64: 15, 8>}, {pipeline_mode = #tpu.pipeline_mode<synchronous>, transform_indices = @transform_2, window_bounds = array<i64: 1, 8>}, {pipeline_mode = #tpu.pipeline_mode<synchronous>, transform_indices = @transform_3, window_bounds = array<i64: 8, 8>}, {pipeline_mode = #tpu.pipeline_mode<synchronous>, transform_indices = @transform_4, window_bounds = array<i64: 1, 8>}, {transform_indices = @transform_5, window_bounds = array<i64: 8, 8>}]} {
    %c0 = arith.constant 0 : index
    %c0_0 = arith.constant 0 : index
    %0 = vector.load %arg1[%c0, %c0_0] : memref<8x15xf32, #tpu.memory_space<vmem>>, vector<8x15xf32>
    %c0_1 = arith.constant 0 : index
    %c0_2 = arith.constant 0 : index
    %1 = vector.load %arg2[%c0_1, %c0_2] : memref<15x8xf32, #tpu.memory_space<vmem>>, vector<15x8xf32>
    %cst = arith.constant dense<0.000000e+00> : vector<8x8xf32>
    %2 = tpu.matmul %0, %1, %cst {dimension_numbers = #tpu.dot_dimension_numbers<[1], [0], [0], [1], [0, 0, 1, 1], [], []>} : vector<8x15xf32>, vector<15x8xf32>, vector<8x8xf32> -> vector<8x8xf32>
    %c0_3 = arith.constant 0 : index
    %c0_4 = arith.constant 0 : index
    %3 = vector.load %arg3[%c0_3, %c0_4] : memref<1x8xf32, #tpu.memory_space<vmem>>, vector<1x8xf32>
    %4 = vector.broadcast %3 : vector<1x8xf32> to vector<8x8xf32>
    %5 = arith.addf %2, %4 : vector<8x8xf32>
    %cst_5 = arith.constant 0.000000e+00 : f32
    %6 = vector.broadcast %cst_5 : f32 to vector<8x8xf32>
    %7 = arith.maximumf %5, %6 : vector<8x8xf32>
    %c0_6 = arith.constant 0 : index
    %c0_7 = arith.constant 0 : index
    %8 = vector.load %arg4[%c0_6, %c0_7] : memref<8x8xf32, #tpu.memory_space<vmem>>, vector<8x8xf32>
    %cst_8 = arith.constant dense<0.000000e+00> : vector<8x8xf32>
    %9 = tpu.matmul %7, %8, %cst_8 {dimension_numbers = #tpu.dot_dimension_numbers<[1], [0], [0], [1], [0, 0, 1, 1], [], []>} : vector<8x8xf32>, vector<8x8xf32>, vector<8x8xf32> -> vector<8x8xf32>
    %c0_9 = arith.constant 0 : index
    %c0_10 = arith.constant 0 : index
    %10 = vector.load %arg5[%c0_9, %c0_10] : memref<1x8xf32, #tpu.memory_space<vmem>>, vector<1x8xf32>
    %11 = vector.broadcast %10 : vector<1x8xf32> to vector<8x8xf32>
    %12 = arith.addf %9, %11 : vector<8x8xf32>
    %13 = tpu.iota {dimensions = array<i32: 1>} : vector<8x8xi32>
    %c4_i32 = arith.constant 4 : i32
    %14 = vector.broadcast %c4_i32 : i32 to vector<8x8xi32>
    %15 = arith.cmpi slt, %13, %14 : vector<8x8xi32>
    %cst_11 = arith.constant 0.000000e+00 : f32
    %16 = vector.broadcast %cst_11 : f32 to vector<8x8xf32>
    %17 = arith.maximumf %12, %16 : vector<8x8xf32>
    %18 = math.absf %12 : vector<8x8xf32>
    %cst_12 = arith.constant 0.000000e+00 : f32
    %19 = vector.broadcast %cst_12 : f32 to vector<8x8xf32>
    %20 = arith.subf %19, %18 : vector<8x8xf32>
    %21 = math.exp %20 : vector<8x8xf32>
    %22 = math.log1p %21 : vector<8x8xf32>
    %23 = arith.addf %17, %22 : vector<8x8xf32>
    %24 = arith.select %15, %12, %23 : vector<8x8xi1>, vector<8x8xf32>
    %c0_13 = arith.constant 0 : index
    %c0_14 = arith.constant 0 : index
    %25 = vector.load %arg6[%c0_13, %c0_14] : memref<8x8xf32, #tpu.memory_space<vmem>>, vector<8x8xf32>
    tpu.vector_store %arg6[%c0_13, %c0_14], %24 {strides = array<i32>} : memref<8x8xf32, #tpu.memory_space<vmem>>, vector<8x8xf32>,
    return
  }
  func.func @transform_0(%arg0: i32) -> (i32, i32) {
    %c0_i32 = arith.constant 0 : i32
    %c0_i32_0 = arith.constant 0 : i32
    return %arg0, %c0_i32 : i32, i32
  }
  func.func @transform_1(%arg0: i32) -> (i32, i32) {
    %c0_i32 = arith.constant 0 : i32
    %c0_i32_0 = arith.constant 0 : i32
    %c0_i32_1 = arith.constant 0 : i32
    return %c0_i32, %c0_i32_0 : i32, i32
  }
  func.func @transform_2(%arg0: i32) -> (i32, i32) {
    %c0_i32 = arith.constant 0 : i32
    %c0_i32_0 = arith.constant 0 : i32
    %c0_i32_1 = arith.constant 0 : i32
    return %c0_i32, %c0_i32_0 : i32, i32
  }
  func.func @transform_3(%arg0: i32) -> (i32, i32) {
    %c0_i32 = arith.constant 0 : i32
    %c0_i32_0 = arith.constant 0 : i32
    %c0_i32_1 = arith.constant 0 : i32
    return %c0_i32, %c0_i32_0 : i32, i32
  }
  func.func @transform_4(%arg0: i32) -> (i32, i32) {
    %c0_i32 = arith.constant 0 : i32
    %c0_i32_0 = arith.constant 0 : i32
    %c0_i32_1 = arith.constant 0 : i32
    return %c0_i32, %c0_i32_0 : i32, i32
  }
  func.func @transform_5(%arg0: i32) -> (i32, i32) {
    %c0_i32 = arith.constant 0 : i32
    %c0_i32_0 = arith.constant 0 : i32
    return %arg0, %c0_i32 : i32, i32
  }
}

</mosaic_0001>

<llo_original>
// kernel: tpu_custom_call.1
$region0: #{tpu_custom_call.1}
  #allocation0 [shape = 'u32[]', space=smem, size = 0x4, offset = 0x4, fixed_abs, tag = 'smem constant byte address 0x4 - core index']
  #allocation1 [shape = 'u32[144,128]{1,0:T(1,128)}', space=vmem, size = 0x12000, scoped, tag = 'internal scratch']
  %s0 = inlined_call_operand.vmem [shape: f32[8,15], index: 0, kind: input, shape index: {}]
  %s1 = inlined_call_operand.vmem [shape: f32[15,8], index: 1, kind: input, shape index: {}]
  %s2 = inlined_call_operand.vmem [shape: f32[1,8], index: 2, kind: input, shape index: {}]
  %s3 = inlined_call_operand.vmem [shape: f32[8,8], index: 3, kind: input, shape index: {}]
  %s4 = inlined_call_operand.vmem [shape: f32[1,8], index: 4, kind: input, shape index: {}]
  %s5 = inlined_call_operand.hbm [shape: f32[8,8], index: 5, kind: output, shape index: {}]
  %s6 = sld [smem:[#allocation0]]
  $region30: #{tpu_custom_call.1} parent=0
    _
  %s8 = ssub.s32 1, %s6
  %s9 = scalar_select 0, %s8, %s6
  $region1: #{tpu_custom_call.1} parent=0
    #allocation2 [shape = 'u8[4096]{0}', space=vmem, size = 0x1000, scoped, tag = 'output window, operand 0, single buffered']
    #allocation3 [shape = 's32[1]{0}', space=sflag, size = 0x4, scoped, tag = 'scoped memory for tpu_custom_call.1']
    %10 = vsyncpa [#allocation3], 0
    // Predicated region
    $region2: #{tpu_custom_call.1} parent=1 // pred_check
      _
    $region3: #{tpu_custom_call.1} parent=1 // pred_check_branch
      %12 = sbr.rel (0) target = $region5
    $region4: #{tpu_custom_call.1} parent=1 // pred_region
      _
    $region5: #{tpu_custom_call.1} parent=1 // pred_fallthru
      _
    // Predicated region
    $region6: #{tpu_custom_call.1} parent=1 // pred_check
      _
    $region7: #{tpu_custom_call.1} parent=1 // pred_check_branch
      %14 = sbr.rel (0) target = $region9
    $region8: #{tpu_custom_call.1} parent=1 // pred_region
      _
    $region9: #{tpu_custom_call.1} parent=1 // pred_fallthru
      _
    // Predicated region
    $region10: #{tpu_custom_call.1} parent=1 // pred_check
      _
    $region11: #{tpu_custom_call.1} parent=1 // pred_check_branch
      %16 = sbr.rel (0) target = $region13
    $region12: #{tpu_custom_call.1} parent=1 // pred_region
      _
    $region13: #{tpu_custom_call.1} parent=1 // pred_fallthru
      _
    // Predicated region
    $region14: #{tpu_custom_call.1} parent=1 // pred_check
      _
    $region15: #{tpu_custom_call.1} parent=1 // pred_check_branch
      %18 = sbr.rel (0) target = $region17
    $region16: #{tpu_custom_call.1} parent=1 // pred_region
      _
    $region17: #{tpu_custom_call.1} parent=1 // pred_fallthru
      _
    // Predicated region
    $region18: #{tpu_custom_call.1} parent=1 // pred_check
      _
    $region19: #{tpu_custom_call.1} parent=1 // pred_check_branch
      %20 = sbr.rel (0) target = $region21
    $region20: #{tpu_custom_call.1} parent=1 // pred_region
      _
    $region21: #{tpu_custom_call.1} parent=1 // pred_fallthru
      _
    %v21 = vld [vmem:[%s0] sm:$0xff]
    %v22 = vld [vmem:[%s1] sm:$0xff]
    %v23 = vld [vmem:[%s1 + $0x8] sm:$0x7f]
    %v24 = vld [vmem:[%s2] sm:$0x1]
    %v26 = vlaneseq
    %v27 = vshrl.u32 %v26, 7
    %v28 = vsub.s32 0, %v27
    %v29 = vrot.slane %v24, %v28
    %vm31 = vcmask 121856
    %v33 = vsel %vm31, %v21, 0
    %vm35 = vcmask 1046528
    %v37 = vsel %vm35, %v23, 0
    %39 = vmatprep.subr.mxu0 0.0
    %40 = vmatpush1.msra.mxu0 %v22
    %41 = vmatprep.subr.mxu0 0.0
    %42 = vmatpush1.msra.mxu0 %v37
    %43 = vmatprep.subr.mxu0 0.0
    %44 = vmatpush1.msra.mxu0 0.0
    %45 = vmatprep.subr.mxu0 0.0
    %46 = vmatpush1.msra.mxu0 0.0
    %47 = vmatprep.subr.mxu0 0.0
    %48 = vmatpush1.msra.mxu0 0.0
    %49 = vmatprep.subr.mxu0 0.0
    %50 = vmatpush1.msra.mxu0 0.0
    %51 = vmatprep.subr.mxu0 0.0
    %52 = vmatpush1.msra.mxu0 0.0
    %53 = vmatprep.subr.mxu0 0.0
    %54 = vmatpush1.msra.mxu0 0.0
    %55 = vmatprep.subr.mxu0 0.0
    %56 = vmatpush1.msra.mxu0 0.0
    %57 = vmatprep.subr.mxu0 0.0
    %58 = vmatpush1.msra.mxu0 0.0
    %59 = vmatprep.subr.mxu0 0.0
    %60 = vmatpush1.msra.mxu0 0.0
    %61 = vmatprep.subr.mxu0 0.0
    %62 = vmatpush1.msra.mxu0 0.0
    %63 = vmatprep.subr.mxu0 0.0
    %64 = vmatpush1.msra.mxu0 0.0
    %65 = vmatprep.subr.mxu0 0.0
    %66 = vmatpush1.msra.mxu0 0.0
    %67 = vmatprep.subr.mxu0 0.0
    %68 = vmatpush1.msra.mxu0 0.0
    %69 = vmatprep.subr.mxu0 0.0
    %70 = vmatpush1.msra.mxu0 0.0
    %71 = vmatprep.subr.mxu0 0.0
    %72 = vmatpush1.msra.mxu0 0.0
    %73 = vmatprep.subr.mxu0 0.0
    %74 = vmatpush1.msra.mxu0 0.0
    %75 = vmatprep.subr.mxu0 0.0
    %76 = vmatpush1.msra.mxu0 0.0
    %77 = vmatprep.subr.mxu0 0.0
    %78 = vmatpush1.msra.mxu0 0.0
    %79 = vmatprep.subr.mxu0 0.0
    %80 = vmatpush1.msra.mxu0 0.0
    %81 = vmatprep.subr.mxu0 0.0
    %82 = vmatpush1.msra.mxu0 0.0
    %83 = vmatprep.subr.mxu0 0.0
    %84 = vmatpush1.msra.mxu0 0.0
    %85 = vmatprep.subr.mxu0 0.0
    %86 = vmatpush1.msra.mxu0 0.0
    %87 = vmatprep.subr.mxu0 0.0
    %88 = vmatpush1.msra.mxu0 0.0
    %89 = vmatprep.subr.mxu0 0.0
    %90 = vmatpush1.msra.mxu0 0.0
    %91 = vmatprep.subr.mxu0 0.0
    %92 = vmatpush1.msra.mxu0 0.0
    %93 = vmatprep.subr.mxu0 0.0
    %94 = vmatpush1.msra.mxu0 0.0
    %95 = vmatprep.subr.mxu0 0.0
    %96 = vmatpush1.msra.mxu0 0.0
    %97 = vmatprep.subr.mxu0 0.0
    %98 = vmatpush1.msra.mxu0 0.0
    %99 = vmatprep.subr.mxu0 0.0
    %100 = vmatpush1.msra.mxu0 0.0
    %101 = vmatprep.subr.mxu0 0.0
    %102 = vmatpush1.msra.mxu0 0.0
    %103 = vmatprep.mubr.f32.mxu0 0.0
    %104 = vmatmul.mubr.f32.gmra.mrb[0].mxu0 %v33
    %v105 = vpop.f32.mrb[0].mxu0
    %v106 = vadd.f32 %v29, %v105
    %v107 = vpop.f32.mrb[0].mxu0
    %108 = vdwg.mxu0
    %v109 = vmax.f32 %v106, 0.0
    %v110 = vld [vmem:[%s3] sm:$0xff]
    %v111 = vld [vmem:[%s4] sm:$0x1]
    %v113 = vlaneseq
    %v114 = vshrl.u32 %v113, 7
    %v115 = vsub.s32 0, %v114
    %v116 = vrot.slane %v111, %v115
    %vm118 = vcmask 64512
    %v120 = vsel %vm118, %v109, 0
    %122 = vmatprep.subr.mxu0 0.0
    %123 = vmatpush1.msra.mxu0 %v110
    %124 = vmatprep.subr.mxu0 0.0
    %125 = vmatpush1.msra.mxu0 0.0
    %126 = vmatprep.subr.mxu0 0.0
    %127 = vmatpush1.msra.mxu0 0.0
    %128 = vmatprep.subr.mxu0 0.0
    %129 = vmatpush1.msra.mxu0 0.0
    %130 = vmatprep.subr.mxu0 0.0
    %131 = vmatpush1.msra.mxu0 0.0
    %132 = vmatprep.subr.mxu0 0.0
    %133 = vmatpush1.msra.mxu0 0.0
    %134 = vmatprep.subr.mxu0 0.0
    %135 = vmatpush1.msra.mxu0 0.0
    %136 = vmatprep.subr.mxu0 0.0
    %137 = vmatpush1.msra.mxu0 0.0
    %138 = vmatprep.subr.mxu0 0.0
    %139 = vmatpush1.msra.mxu0 0.0
    %140 = vmatprep.subr.mxu0 0.0
    %141 = vmatpush1.msra.mxu0 0.0
    %142 = vmatprep.subr.mxu0 0.0
    %143 = vmatpush1.msra.mxu0 0.0
    %144 = vmatprep.subr.mxu0 0.0
    %145 = vmatpush1.msra.mxu0 0.0
    %146 = vmatprep.subr.mxu0 0.0
    %147 = vmatpush1.msra.mxu0 0.0
    %148 = vmatprep.subr.mxu0 0.0
    %149 = vmatpush1.msra.mxu0 0.0
    %150 = vmatprep.subr.mxu0 0.0
    %151 = vmatpush1.msra.mxu0 0.0
    %152 = vmatprep.subr.mxu0 0.0
    %153 = vmatpush1.msra.mxu0 0.0
    %154 = vmatprep.subr.mxu0 0.0
    %155 = vmatpush1.msra.mxu0 0.0
    %156 = vmatprep.subr.mxu0 0.0
    %157 = vmatpush1.msra.mxu0 0.0
    %158 = vmatprep.subr.mxu0 0.0
    %159 = vmatpush1.msra.mxu0 0.0
    %160 = vmatprep.subr.mxu0 0.0
    %161 = vmatpush1.msra.mxu0 0.0
    %162 = vmatprep.subr.mxu0 0.0
    %163 = vmatpush1.msra.mxu0 0.0
    %164 = vmatprep.subr.mxu0 0.0
    %165 = vmatpush1.msra.mxu0 0.0
    %166 = vmatprep.subr.mxu0 0.0
    %167 = vmatpush1.msra.mxu0 0.0
    %168 = vmatprep.subr.mxu0 0.0
    %169 = vmatpush1.msra.mxu0 0.0
    %170 = vmatprep.subr.mxu0 0.0
    %171 = vmatpush1.msra.mxu0 0.0
    %172 = vmatprep.subr.mxu0 0.0
    %173 = vmatpush1.msra.mxu0 0.0
    %174 = vmatprep.subr.mxu0 0.0
    %175 = vmatpush1.msra.mxu0 0.0
    %176 = vmatprep.subr.mxu0 0.0
    %177 = vmatpush1.msra.mxu0 0.0
    %178 = vmatprep.subr.mxu0 0.0
    %179 = vmatpush1.msra.mxu0 0.0
    %180 = vmatprep.subr.mxu0 0.0
    %181 = vmatpush1.msra.mxu0 0.0
    %182 = vmatprep.subr.mxu0 0.0
    %183 = vmatpush1.msra.mxu0 0.0
    %184 = vmatprep.subr.mxu0 0.0
    %185 = vmatpush1.msra.mxu0 0.0
    %186 = vmatprep.mubr.f32.mxu0 0.0
    %187 = vmatmul.mubr.f32.gmra.mrb[0].mxu0 %v120
    %v188 = vpop.f32.mrb[0].mxu0
    %v189 = vadd.f32 %v116, %v188
    %v190 = vpop.f32.mrb[0].mxu0
    %191 = vdwg.mxu0
    %v192 = vlaneseq
    %v193 = vand.u32 %v192, 127
    %vm194 = vcmp.lt.s32.totalorder %v193, 4
    %v195 = vmax.f32 %v189, 0.0
    %v196 = vand.u32 2147483647, %v189
    %v197 = vsub.f32 0.0, %v196
    %v198 = vmul.f32 %v197, 1.442695
    %v199 = vpow.pop %v198
    %v200 = vadd.f32 %v199, 1.0
    %v201 = vlog2.pop %v200
    %v202 = vmul.f32 %v201, 0.6931472
    %v203 = vmul.f32 -0.5, %v199
    %v204 = vadd.f32 %v203, 1.0
    %v205 = vmul.f32 %v204, %v199
    %v206 = vand.u32 2147483647, %v199
    %vm207 = vcmp.lt.f32.partialorder %v206, 0.0004427343
    %v208 = vsel %vm207, %v205, %v202
    %v209 = vadd.f32 %v195, %v208
    %v210 = vsel %vm194, %v189, %v209
    %211 = vst.msk [vmem:[#allocation2] sm:$0xff] %vm118, %v210
    // Predicated region
    $region22: #{tpu_custom_call.1} parent=1 // pred_check
      _
    $region23: #{tpu_custom_call.1} parent=1 // pred_check_branch
      %213 = sbr.rel (0) target = $region25
    $region24: #{tpu_custom_call.1} parent=1 // pred_region
      %s215 = ssub.s32 128, 128
      %216 = vsyncadd [#allocation3], %s215
      %s218 = sshll.u32 [#allocation2], 4
      %s219 = int_to_ptr.vmem [resolvable:$true] %s218
      %221 = dma.vmem_to_hbm [thread:$0]  %s219, 128, %s5, [#allocation3]
    $region25: #{tpu_custom_call.1} parent=1 // pred_fallthru
      _
    // Predicated region
    $region26: #{tpu_custom_call.1} parent=1 // pred_check
      _
    $region27: #{tpu_custom_call.1} parent=1 // pred_check_branch
      %223 = sbr.rel (0) target = $region29
    $region28: #{tpu_custom_call.1} parent=1 // pred_region
      %224 = dma.done [#allocation3], 128
    $region29: #{tpu_custom_call.1} parent=1 // pred_fallthru
      _
    %225 = vsyncpa [#allocation3], 1

</llo_original>
